<compile_context>
chip_gen: v5e
topology: v5e:2x2
jax: 0.10.0
libtpu: 0.0.40
codegen_flags: <defaults>
</compile_context>

<pallas_src>
import functools

import jax
import jax.numpy as jnp
from jax.experimental import pallas as pl
from jax.experimental.pallas import tpu as pltpu


def _dce_kernel(x_ref, c2_ref, csq_ref, dist_ref, *, bf16_matmul):
    """One (TB, TC) tile of dist = ||x||^2 + ||c||^2 - 2 x @ c."""
    x = x_ref[...]                                            # (TB, D) f32, streamed
    # per-sample squared norms, kept in f32 (lane reduce rides the XLU slot)
    features_square = jnp.sum(x * x, axis=1, keepdims=True)   # (TB, 1)
    lhs = x.astype(jnp.bfloat16) if bf16_matmul else x
    # The 2.0 is already folded into c2_ref by the wrapper -> no (TB, TC) VPU mul.
    features_into_centers = jnp.dot(                          # MXU, f32 accumulation
        lhs, c2_ref[...], preferred_element_type=jnp.float32)
    # Matches the PyTorch module exactly (no clamp); a^2+b^2-2ab can go slightly
    # negative near a center due to f32 cancellation — clamp downstream if needed.
    dist_ref[...] = (
        features_square + csq_ref[...] - features_into_centers
    ).astype(dist_ref.dtype)
    # TODO(synk): emit dist as bfloat16 (out_shape dtype) when the consumer allows;
    # the dist writeback dominates HBM traffic when n_classes >> feat_dim.


def _vmem_budget_bytes():
    """Generation-aware VMEM sizing: (tile budget, scoped limit, physical capacity)."""
    try:
        cap = int(pltpu.get_tpu_info().vmem_capacity_bytes)  # 128 MiB v5e/v6e, 64 MiB/TC v7x
    except Exception:
        cap = 64 * 1024 * 1024                               # conservative fallback (v7x/TC)
    budget = int(cap * 0.50)   # what the tile picker sizes double-buffered tiles against
    limit = int(cap * 0.70)    # scoped-VMEM limit handed to Mosaic (compiler headroom kept)
    return budget, limit, cap


def _pick_tiles(B, D, Cp, budget_bytes):
    """Pick (TB, TC): batch / class tile sizes fitting a double-buffered VMEM budget."""
    bf32 = 4
    # Class tile: largest lane-dense slice whose double-buffered centers (+csq)
    # tile fits in at most half the budget (rest goes to x / dist streaming).
    TC = Cp
    while TC > 128 and 2 * bf32 * (D + 8) * TC > budget_bytes // 2:
        TC = ((TC // 2 + 127) // 128) * 128
    TC = max(128, TC)
    resident = 2 * bf32 * (D + 8) * TC
    per_row = 2 * bf32 * (D + TC)           # double-buffered x row + dist row
    avail = max(budget_bytes - resident, per_row * 8)
    tb = min(2048, avail // per_row)
    if tb >= 256:
        tb = (tb // 256) * 256              # whole MXU systolic passes on the M axis
    else:
        tb = max(8, (tb // 8) * 8)          # sublane multiple
    b_ceil8 = max(8, ((B + 7) // 8) * 8)
    return int(min(tb, b_ceil8)), int(TC)


def dce_loss_forward(x, centers, *, bf16_matmul_min_d=512):
    """Returns (centers, dist) exactly like the PyTorch module's forward."""
    B, D = x.shape
    D2, C = centers.shape
    assert D == D2, "feature dims of x and centers must match"

    x = x.astype(jnp.float32)
    centers_f32 = centers.astype(jnp.float32)

    budget, vmem_limit, cap = _vmem_budget_bytes()

    # Lane-dense class axis, split into whole (D, TC) tiles.
    Cp0 = max(128, pl.cdiv(C, 128) * 128)
    TB, TC = _pick_tiles(B, D, Cp0, budget)
    Cp = pl.cdiv(Cp0, TC) * TC
    nC = Cp // TC

    # Per-step VMEM footprint sanity check: clear error instead of a Mosaic OOM.
    est = 2 * 4 * (TB * D + (D + 8) * TC + TB * TC)
    if est > int(0.9 * cap):
        raise ValueError(
            f"dce_loss tiling (TB={TB}, TC={TC}, D={D}) needs ~{est} bytes of VMEM, "
            f"more than this TPU generation provides ({cap} bytes).")
    vmem_limit = min(int(0.95 * cap), max(vmem_limit, est + (4 << 20)))

    # One-time wrapper work on the (D, C)-sized centers (tiny vs x / dist traffic):
    centers_p = (jnp.pad(centers_f32, ((0, 0), (0, Cp - C))) if Cp != C
                 else centers_f32)
    centers_square = jnp.sum(centers_p * centers_p, axis=0, keepdims=True)  # (1, Cp) f32
    use_bf16 = D >= bf16_matmul_min_d
    c2 = (2.0 * centers_p).astype(jnp.bfloat16 if use_bf16 else jnp.float32)

    # Batch tiling; only materialize a padded copy of x when B is not tile-aligned.
    nB = pl.cdiv(B, TB)
    Bp = nB * TB
    x_in = x if Bp == B else jnp.pad(x, ((0, Bp - B), (0, 0)))

    grid = (nC, nB)  # class tiles outer (centers resident per tile), batch inner

    dist_p = pl.pallas_call(
        functools.partial(_dce_kernel, bf16_matmul=use_bf16),
        out_shape=jax.ShapeDtypeStruct((Bp, Cp), jnp.float32),
        grid_spec=pl.GridSpec(
            grid=grid,
            in_specs=[
                pl.BlockSpec((TB, D), lambda j, i: (i, 0)),   # x: streamed over batch
                pl.BlockSpec((D, TC), lambda j, i: (0, j)),   # 2*centers: resident per class tile
                pl.BlockSpec((1, TC), lambda j, i: (0, j)),   # ||centers||^2: resident per class tile
            ],
            out_specs=pl.BlockSpec((TB, TC), lambda j, i: (i, j)),
        ),
        compiler_params=pltpu.CompilerParams(
            # Both axes are independent -> megacore may shard either on v7x.
            # TODO(synk): if plain "parallel" does not split across v7x's two
            # TensorCores in this Mosaic build, switch the batch axis to
            # pltpu.CORE_PARALLEL (each TC then holds its own resident centers copy).
            dimension_semantics=("parallel", "parallel"),
            vmem_limit_bytes=int(vmem_limit),
        ),
    )(x_in, c2, centers_square)
    # TODO(synk): when nC == 1, single-buffer the grid-invariant centers/csq blocks
    # (pipeline_mode=pl.Buffered(1)) to reclaim their second VMEM buffer on v7x.

    dist = dist_p if (Bp == B and Cp == C) else dist_p[:B, :C]
    return centers, dist


def init_centers(key, feat_dim, n_classes):
    # kaiming_normal_ on a (feat_dim, n_classes) tensor:
    # fan_in = size(1) = n_classes, gain = sqrt(2)  ->  std = sqrt(2 / n_classes)
    std = jnp.sqrt(2.0 / n_classes)
    return std * jax.random.normal(key, (feat_dim, n_classes), dtype=jnp.float32)


if __name__ == "__main__":
    key = jax.random.PRNGKey(0)
    k_x, k_c = jax.random.split(key)

    batch = 8
    feat_dim = 32
    n_classes = 8

    x = jax.random.normal(k_x, (batch, feat_dim), dtype=jnp.float32)
    centers = init_centers(k_c, feat_dim, n_classes)

    centers_out, dist = dce_loss_forward(x, centers)
    jax.block_until_ready(dist)

    # reference check in plain JAX
    fs = jnp.sum(x * x, axis=1, keepdims=True)
    cs = jnp.sum(centers * centers, axis=0, keepdims=True)
    ref = fs + cs - 2.0 * (x @ centers)
    assert dist.shape == (batch, n_classes)
    assert jnp.allclose(dist, ref, atol=1e-4, rtol=1e-4)
    assert centers_out.shape == (feat_dim, n_classes)

    print("KERNEL_OK")
</pallas_src>

<mosaic_0001>
module attributes {stable_mosaic.version = 11 : i64} {
  func.func @_dce_kernel(%arg0: i32, %arg1: i32, %arg2: memref<8x32xf32, #tpu.memory_space<vmem>>, %arg3: memref<32x128xf32, #tpu.memory_space<vmem>>, %arg4: memref<1x128xf32, #tpu.memory_space<vmem>>, %arg5: memref<8x128xf32, #tpu.memory_space<vmem>>) attributes {dimension_semantics = [#tpu.dimension_semantics<parallel>, #tpu.dimension_semantics<parallel>], iteration_bounds = array<i64: 1, 1>, scalar_prefetch = 0 : i64, scratch_operands = 0 : i64, tpu.core_type = #tpu.core_type<tc>, window_params = [{transform_indices = @transform_0, window_bounds = array<i64: 8, 32>}, {transform_indices = @transform_1, window_bounds = array<i64: 32, 128>}, {transform_indices = @transform_2, window_bounds = array<i64: 1, 128>}, {transform_indices = @transform_3, window_bounds = array<i64: 8, 128>}]} {
    %c0 = arith.constant 0 : index
    %c0_0 = arith.constant 0 : index
    %0 = vector.load %arg2[%c0, %c0_0] : memref<8x32xf32, #tpu.memory_space<vmem>>, vector<8x32xf32>
    %1 = arith.mulf %0, %0 : vector<8x32xf32>
    %cst = arith.constant dense<0.000000e+00> : vector<8xf32>
    %2 = vector.multi_reduction <add>, %1, %cst [1] : vector<8x32xf32> to vector<8xf32>
    %3 = vector.shape_cast %2 : vector<8xf32> to vector<8x1xf32>
    %c0_1 = arith.constant 0 : index
    %c0_2 = arith.constant 0 : index
    %4 = vector.load %arg3[%c0_1, %c0_2] : memref<32x128xf32, #tpu.memory_space<vmem>>, vector<32x128xf32>
    %cst_3 = arith.constant dense<0.000000e+00> : vector<8x128xf32>
    %5 = tpu.matmul %0, %4, %cst_3 {dimension_numbers = #tpu.dot_dimension_numbers<[1], [0], [0], [1], [0, 0, 1, 1], [], []>} : vector<8x32xf32>, vector<32x128xf32>, vector<8x128xf32> -> vector<8x128xf32>
    %c0_4 = arith.constant 0 : index
    %c0_5 = arith.constant 0 : index
    %6 = vector.load %arg4[%c0_4, %c0_5] : memref<1x128xf32, #tpu.memory_space<vmem>>, vector<1x128xf32>
    %7 = vector.broadcast %3 : vector<8x1xf32> to vector<8x128xf32>
    %8 = vector.broadcast %6 : vector<1x128xf32> to vector<8x128xf32>
    %9 = arith.addf %7, %8 : vector<8x128xf32>
    %10 = arith.subf %9, %5 : vector<8x128xf32>
    %c0_6 = arith.constant 0 : index
    %c0_7 = arith.constant 0 : index
    %11 = vector.load %arg5[%c0_6, %c0_7] : memref<8x128xf32, #tpu.memory_space<vmem>>, vector<8x128xf32>
    tpu.vector_store %arg5[%c0_6, %c0_7], %10 {strides = array<i32>} : memref<8x128xf32, #tpu.memory_space<vmem>>, vector<8x128xf32>,
    return
  }
  func.func @transform_0(%arg0: i32, %arg1: i32) -> (i32, i32) {
    %c0_i32 = arith.constant 0 : i32
    %c0_i32_0 = arith.constant 0 : i32
    return %arg1, %c0_i32 : i32, i32
  }
  func.func @transform_1(%arg0: i32, %arg1: i32) -> (i32, i32) {
    %c0_i32 = arith.constant 0 : i32
    %c0_i32_0 = arith.constant 0 : i32
    return %c0_i32, %arg0 : i32, i32
  }
  func.func @transform_2(%arg0: i32, %arg1: i32) -> (i32, i32) {
    %c0_i32 = arith.constant 0 : i32
    %c0_i32_0 = arith.constant 0 : i32
    return %c0_i32, %arg0 : i32, i32
  }
  func.func @transform_3(%arg0: i32, %arg1: i32) -> (i32, i32) {
    %c0_i32 = arith.constant 0 : i32
    return %arg1, %arg0 : i32, i32
  }
}

</mosaic_0001>

<llo_original>
// kernel: tpu_custom_call.1
$region0: #{tpu_custom_call.1}
  #allocation0 [shape = 'u32[]', space=smem, size = 0x4, offset = 0x4, fixed_abs, tag = 'smem constant byte address 0x4 - core index']
  #allocation1 [shape = 'u32[72,128]{1,0:T(1,128)}', space=vmem, size = 0x9000, scoped, tag = 'internal scratch']
  %s0 = inlined_call_operand.hbm [shape: f32[8,32], index: 0, kind: input, shape index: {}]
  %s1 = inlined_call_operand.hbm [shape: f32[32,128], index: 1, kind: input, shape index: {}]
  %s2 = inlined_call_operand.vmem [shape: f32[1,128], index: 2, kind: input, shape index: {}]
  %s3 = inlined_call_operand.hbm [shape: f32[8,128], index: 3, kind: output, shape index: {}]
  %s4 = sld [smem:[#allocation0]]
  $region30: #{tpu_custom_call.1} parent=0
    _
  %s6 = ssub.s32 1, %s4
  %s7 = scalar_select 0, %s6, %s4
  $region1: #{tpu_custom_call.1} parent=0
    #allocation2 [shape = 'u8[4096]{0}', space=vmem, size = 0x1000, scoped, tag = 'input window, operand 0, single buffered']
    #allocation3 [shape = 's32[1]{0}', space=sflag, size = 0x4, scoped, tag = 'scoped memory for tpu_custom_call.1']
    #allocation4 [shape = 's32[1]{0}', space=sflag, size = 0x4, scoped, tag = 'scoped memory for tpu_custom_call.1']
    #allocation5 [shape = 'u8[16384]{0}', space=vmem, size = 0x4000, scoped, tag = 'input window, operand 1, single buffered']
    #allocation6 [shape = 's32[1]{0}', space=sflag, size = 0x4, scoped, tag = 'scoped memory for tpu_custom_call.1']
    #allocation7 [shape = 'u8[4096]{0}', space=vmem, size = 0x1000, scoped, tag = 'output window, operand 0, single buffered']
    %8 = vsyncpa [#allocation3], 0
    %9 = vsyncpa [#allocation6], 0
    %10 = vsyncpa [#allocation4], 0
    // Predicated region
    $region2: #{tpu_custom_call.1} parent=1 // pred_check
      _
    $region3: #{tpu_custom_call.1} parent=1 // pred_check_branch
      %12 = sbr.rel (0) target = $region5
    $region4: #{tpu_custom_call.1} parent=1 // pred_region
      %14 = vsyncadd [#allocation3], 0
      %s16 = sshll.u32 %s0, 4
      %s17 = int_to_ptr.hbm [resolvable:$true] %s16
      %s18 = sshll.u32 [#allocation2], 4
      %s19 = int_to_ptr.vmem [resolvable:$true] %s18
      %21 = dma.hbm_to_vmem [thread:$0]  %s17, 128, %s19, [#allocation3]
    $region5: #{tpu_custom_call.1} parent=1 // pred_fallthru
      _
    // Predicated region
    $region6: #{tpu_custom_call.1} parent=1 // pred_check
      _
    $region7: #{tpu_custom_call.1} parent=1 // pred_check_branch
      %23 = sbr.rel (0) target = $region9
    $region8: #{tpu_custom_call.1} parent=1 // pred_region
      %25 = vsyncadd [#allocation6], 0
      %s26 = sshll.u32 %s1, 4
      %s27 = int_to_ptr.hbm [resolvable:$true] %s26
      %s28 = sshll.u32 [#allocation5], 4
      %s29 = int_to_ptr.vmem [resolvable:$true] %s28
      %34 = dma.hbm_to_vmem [thread:$0]  %s27, 512, %s29, [#allocation6], 128, 128, 8
    $region9: #{tpu_custom_call.1} parent=1 // pred_fallthru
      _
    // Predicated region
    $region10: #{tpu_custom_call.1} parent=1 // pred_check
      _
    $region11: #{tpu_custom_call.1} parent=1 // pred_check_branch
      %36 = sbr.rel (0) target = $region13
    $region12: #{tpu_custom_call.1} parent=1 // pred_region
      _
    $region13: #{tpu_custom_call.1} parent=1 // pred_fallthru
      _
    // Predicated region
    $region14: #{tpu_custom_call.1} parent=1 // pred_check
      _
    $region15: #{tpu_custom_call.1} parent=1 // pred_check_branch
      %38 = sbr.rel (0) target = $region17
    $region16: #{tpu_custom_call.1} parent=1 // pred_region
      %40 = dma.done [#allocation3], 128
    $region17: #{tpu_custom_call.1} parent=1 // pred_fallthru
      _
    // Predicated region
    $region18: #{tpu_custom_call.1} parent=1 // pred_check
      _
    $region19: #{tpu_custom_call.1} parent=1 // pred_check_branch
      %42 = sbr.rel (0) target = $region21
    $region20: #{tpu_custom_call.1} parent=1 // pred_region
      %44 = dma.done [#allocation6], 512
    $region21: #{tpu_custom_call.1} parent=1 // pred_fallthru
      _
    %v45 = vld [vmem:[#allocation2] sm:$0xff]
    %v46 = vmul.f32 %v45, %v45
    %vm47 = vcmask 261120
    %v48 = vsel %vm47, %v46, 0.0
    %49 = vadd.xlane.f32.xlu0 %v48
    %v50 = vpop.xlane.xlu0 %49
    %v51 = vld [vmem:[#allocation5] sm:$0xff]
    %v52 = vld [vmem:[#allocation5 + $0x8] sm:$0xff]
    %v53 = vld [vmem:[#allocation5 + $0x10] sm:$0xff]
    %v54 = vld [vmem:[#allocation5 + $0x18] sm:$0xff]
    %v56 = vsel %vm47, %v45, 0
    %58 = vmatpush.msra.mxu0 0.0
    %59 = vmatpush.msra.mxu0 0.0
    %60 = vmatpush.msra.mxu0 0.0
    %61 = vmatpush.msra.mxu0 0.0
    %62 = vmatpush.msra.mxu0 0.0
    %63 = vmatpush.msra.mxu0 0.0
    %64 = vmatpush.msra.mxu0 0.0
    %65 = vmatpush.msra.mxu0 0.0
    %66 = vmatpush.msra.mxu0 0.0
    %67 = vmatpush.msra.mxu0 0.0
    %68 = vmatpush.msra.mxu0 0.0
    %69 = vmatpush.msra.mxu0 0.0
    %70 = vmatpush.msra.mxu0 %v54
    %71 = vmatpush.msra.mxu0 %v53
    %72 = vmatpush.msra.mxu0 %v52
    %73 = vmatpush.msra.mxu0 %v51
    %74 = vmatmul.f32.gmra.mxu0 %v56
    %v75 = vpop.f32.mrf.mxu0
    %v76 = vadd.f32 0.0, %v75
    %77 = vdwg.mxu0
    %v78 = vld [vmem:[%s2] sm:$0x1]
    %v80 = vperm.slane %v78, 0
    %v82 = vadd.f32 %v50, %v80
    %v83 = vsub.f32 %v82, %v76
    %84 = vst [vmem:[#allocation7] sm:$0xff] %v83
    // Predicated region
    $region22: #{tpu_custom_call.1} parent=1 // pred_check
      _
    $region23: #{tpu_custom_call.1} parent=1 // pred_check_branch
      %86 = sbr.rel (0) target = $region25
    $region24: #{tpu_custom_call.1} parent=1 // pred_region
      %88 = vsyncadd [#allocation4], 0
      %s90 = sshll.u32 [#allocation7], 4
      %s91 = int_to_ptr.vmem [resolvable:$true] %s90
      %s92 = sshll.u32 %s3, 4
      %s93 = int_to_ptr.hbm [resolvable:$true] %s92
      %95 = dma.vmem_to_hbm [thread:$0]  %s91, 128, %s93, [#allocation4]
    $region25: #{tpu_custom_call.1} parent=1 // pred_fallthru
      _
    // Predicated region
    $region26: #{tpu_custom_call.1} parent=1 // pred_check
      _
    $region27: #{tpu_custom_call.1} parent=1 // pred_check_branch
      %97 = sbr.rel (0) target = $region29
    $region28: #{tpu_custom_call.1} parent=1 // pred_region
      %99 = dma.done [#allocation4], 128
    $region29: #{tpu_custom_call.1} parent=1 // pred_fallthru
      _
    %100 = vsyncpa [#allocation3], 1
    %101 = vsyncpa [#allocation6], 1
    %102 = vsyncpa [#allocation4], 1

</llo_original>
